<compile_context>
chip_gen: v7x
topology: tpu7x:2x2x1
jax: 0.10.0
libtpu: 0.0.40
codegen_flags: <defaults>
</compile_context>

<pallas_src>
import functools

import jax
import jax.numpy as jnp
from jax import lax
from jax.experimental import pallas as pl
from jax.experimental.pallas import tpu as pltpu

ACT_SLOPE = 0.01  # LeakyReLU negative slope (PyTorch default)

BATHY_SHAPE = (4, 16, 16)       # (C, H, W)
CONV_FILTERS = [8, 16]
DENSE_LAYERS = [32]
LATENT_DIM = 8
BATCH = 2


def _leaky(x):
    return jnp.where(x >= 0.0, x, ACT_SLOPE * x)


# --------------------------------------------------------------------- roll-convention probe
def _roll_probe_kernel(x_ref, o_ref):
    o_ref[...] = pltpu.roll(x_ref[...], shift=1, axis=1)


@functools.lru_cache(maxsize=None)
def _roll_matches_jnp():
    """One-time probe: does pltpu.roll follow jnp.roll (rotate-right) convention?

    Defensive: the tap shifts below are convention-sensitive, and this 1-step probe
    (outside the hot path, cached) makes the kernel correct under either rotate
    convention.
    """
    x = lax.broadcasted_iota(jnp.int32, (8, 128), 1)
    y = pl.pallas_call(
        _roll_probe_kernel,
        out_shape=jax.ShapeDtypeStruct((8, 128), jnp.int32),
        in_specs=[pl.BlockSpec((8, 128), lambda: (0, 0))],
        out_specs=pl.BlockSpec((8, 128), lambda: (0, 0)),
    )(x)
    first = int(y[0, 0])
    if first == 127:      # roll(x,1)[0] == x[-1]  -> jnp.roll semantics
        return True
    if first == 1:        # roll(x,1)[0] == x[1]   -> rotate-left semantics
        return False
    raise RuntimeError(f"unexpected pltpu.roll probe result: {first}")


# ----------------------------------------------------------------------------- fused kernel
def _encoder_kernel(x_ref, w1_ref, b1_ref, w2_ref, b2_ref, wd_ref, bd_ref,
                    wl_ref, bl_ref, z_ref, flat_ref, *,
                    batch, height, width, c2, roll_is_jnp):
    """Whole BathyEncoder forward for the full (tiny) batch in one grid step.

    x_ref : (Cin, B*H*W) f32   channel-major input, batch folded into lanes
    w1/w2 : (Cout, 9*Cin) bf16 3x3 conv weights, tap-major (t = kh*3+kw, ci fastest)
    b1/b2 : (Cout, 1) f32
    wd    : (C2*H*W, Dense) bf16 (pre-transposed), bd: (1, Dense) f32
    wl    : (Dense, Latent) bf16 (pre-transposed), bl: (1, Latent) f32
    z_ref : (B, Latent) f32 output
    flat_ref: (B, C2*H*W) f32 VMEM scratch holding the PyTorch-order flatten
    """
    hw = height * width
    bhw = batch * hw

    # Hoisted once: lane-position helpers + the 9 'same'-padding edge masks
    # (identical for both conv layers; JAX does not CSE broadcasts, so build once).
    lane = lax.broadcasted_iota(jnp.int32, (1, bhw), 1)
    col = lane % width
    row = (lane % hw) // width
    shifts_and_masks = []
    for kh in range(3):
        for kw in range(3):
            dh, dw = kh - 1, kw - 1
            off = dh * width + dw                       # flat-index offset of this tap
            jnp_shift = (-off) % bhw                    # tap[p] = x[p + off]
            shift = jnp_shift if roll_is_jnp else (bhw - jnp_shift) % bhw
            if dh == 0 and dw == 0:
                valid = None
            else:
                valid = ((row + dh >= 0) & (row + dh < height) &
                         (col + dw >= 0) & (col + dw < width))
            shifts_and_masks.append((shift, valid))

    def conv_taps(act_f32):
        """(Cin, B*HW) -> (9*Cin, B*HW) im2col slab, built in-VMEM.

        Each tap is a lane rotation (XLU slot, hides under MXU/VPU) of the
        channel-major activations plus an edge mask; rolling the flattened
        (b, h, w) axis only leaks across row / image boundaries at positions
        the mask zeroes out, so circular wrap is harmless.
        """
        taps = []
        for shift, valid in shifts_and_masks:
            t = act_f32 if shift == 0 else pltpu.roll(act_f32, shift=shift, axis=1)
            if valid is not None:
                t = jnp.where(valid, t, jnp.zeros_like(t))
            taps.append(t)
        return jnp.concatenate(taps, axis=0)

    # --- conv1: one big-K MXU matmul (C1, 9*Cin) @ (9*Cin, B*HW) ------------------
    t1 = conv_taps(x_ref[...]).astype(jnp.bfloat16)
    y1 = jnp.dot(w1_ref[...], t1, preferred_element_type=jnp.float32)
    y1 = _leaky(y1 + b1_ref[...])                       # (C1, B*HW) f32, lane-dense

    # --- conv2 --------------------------------------------------------------------
    t2 = conv_taps(y1).astype(jnp.bfloat16)
    y2 = jnp.dot(w2_ref[...], t2, preferred_element_type=jnp.float32)
    y2 = _leaky(y2 + b2_ref[...])                       # (C2, B*HW) f32

    # --- flatten in PyTorch (C, H, W) order: flat[b, c*HW + hw] = y2[c, b*HW + hw]
    # (static, 128-aligned lane slices; relayout done via cheap masked stores)
    for c in range(c2):
        flat_ref[:, c * hw:(c + 1) * hw] = jnp.concatenate(
            [y2[c:c + 1, b * hw:(b + 1) * hw] for b in range(batch)], axis=0)

    # --- dense: Linear + LeakyReLU, single K=4096 matmul ---------------------------
    h = jnp.dot(flat_ref[...].astype(jnp.bfloat16), wd_ref[...],
                preferred_element_type=jnp.float32)
    h = _leaky(h + bd_ref[...])                         # (B, Dense) f32

    # --- latent Linear -------------------------------------------------------------
    z = jnp.dot(h.astype(jnp.bfloat16), wl_ref[...],
                preferred_element_type=jnp.float32)
    z_ref[...] = (z + bl_ref[...]).astype(z_ref.dtype)


# ----------------------------------------------------------------------------- wrappers
def prepare_params(params):
    """One-time repack of PyTorch-layout parameters into kernel layouts.

    Conv weights (Cout, Cin, 3, 3) -> (Cout, 9*Cin) matching tap order t = kh*3+kw
    (channel fastest); dense/latent weights pre-transposed; MXU operands cast to
    bf16 once here; biases stay f32 (bias + LeakyReLU are computed in f32).
    """
    (w1, b1), (w2, b2) = params["convs"]
    (wd, bd) = params["dense"][0]
    (wl, bl) = params["latent"]

    def conv_w(w):
        cout = w.shape[0]
        return jnp.transpose(w, (0, 2, 3, 1)).reshape(cout, -1).astype(jnp.bfloat16)

    return (
        conv_w(w1), b1.reshape(-1, 1).astype(jnp.float32),
        conv_w(w2), b2.reshape(-1, 1).astype(jnp.float32),
        wd.T.astype(jnp.bfloat16), bd.reshape(1, -1).astype(jnp.float32),
        wl.T.astype(jnp.bfloat16), bl.reshape(1, -1).astype(jnp.float32),
    )


def make_forward(batch, bathy_shape, conv_filters, dense_layers, latent_dim):
    """Builds the fused, jitted BathyEncoder forward (specialized to 2 convs + 1 dense)."""
    cin, height, width = bathy_shape
    c1, c2 = conv_filters
    dense_units = dense_layers[0]
    hw = height * width
    bhw = batch * hw
    flat_dim = c2 * hw
    roll_is_jnp = _roll_matches_jnp()

    kernel = functools.partial(
        _encoder_kernel, batch=batch, height=height, width=width,
        c2=c2, roll_is_jnp=roll_is_jnp)

    fused = pl.pallas_call(
        kernel,
        out_shape=jax.ShapeDtypeStruct((batch, latent_dim), jnp.float32),
        in_specs=[
            pl.BlockSpec((cin, bhw), lambda: (0, 0)),           # x (channel-major)
            pl.BlockSpec((c1, 9 * cin), lambda: (0, 0)),        # conv1 weight
            pl.BlockSpec((c1, 1), lambda: (0, 0)),              # conv1 bias
            pl.BlockSpec((c2, 9 * c1), lambda: (0, 0)),         # conv2 weight
            pl.BlockSpec((c2, 1), lambda: (0, 0)),              # conv2 bias
            pl.BlockSpec((flat_dim, dense_units), lambda: (0, 0)),  # dense weight^T
            pl.BlockSpec((1, dense_units), lambda: (0, 0)),         # dense bias
            pl.BlockSpec((dense_units, latent_dim), lambda: (0, 0)),  # latent weight^T
            pl.BlockSpec((1, latent_dim), lambda: (0, 0)),             # latent bias
        ],
        out_specs=pl.BlockSpec((batch, latent_dim), lambda: (0, 0)),
        scratch_shapes=[pltpu.VMEM((batch, flat_dim), jnp.float32)],
    )

    @jax.jit
    def forward(x_nchw, kparams):
        # NCHW -> channel-major (Cin, B*H*W): the only XLA glue op left.
        x_cm = jnp.transpose(x_nchw, (1, 0, 2, 3)).reshape(cin, bhw)
        return fused(x_cm, *kparams)

    return forward


# ----------------------------------------------------------------------------- reference
def reference_forward(x_nchw, params):
    """Pure-JAX f32 mirror of the PyTorch forward, for correctness checking."""
    h = x_nchw
    for w, b in params["convs"]:
        h = lax.conv_general_dilated(
            h, w, window_strides=(1, 1), padding="SAME",
            dimension_numbers=("NCHW", "OIHW", "NCHW"))
        h = h + b[None, :, None, None]
        h = jnp.where(h >= 0.0, h, ACT_SLOPE * h)
    h = h.reshape(h.shape[0], -1)
    for w, b in params["dense"]:
        h = h @ w.T + b
        h = jnp.where(h >= 0.0, h, ACT_SLOPE * h)
    wl, bl = params["latent"]
    return h @ wl.T + bl


# ----------------------------------------------------------------------------- params
def init_params(key):
    C, H, W = BATHY_SHAPE
    params = {"convs": [], "dense": []}
    in_c = C
    for cout in CONV_FILTERS:
        key, k1, k2 = jax.random.split(key, 3)
        w = 0.1 * jax.random.normal(k1, (cout, in_c, 3, 3), jnp.float32)
        b = 0.1 * jax.random.normal(k2, (cout,), jnp.float32)
        params["convs"].append((w, b))
        in_c = cout
    in_units = in_c * H * W
    for units in DENSE_LAYERS:
        key, k1, k2 = jax.random.split(key, 3)
        w = 0.02 * jax.random.normal(k1, (units, in_units), jnp.float32)
        b = 0.02 * jax.random.normal(k2, (units,), jnp.float32)
        params["dense"].append((w, b))
        in_units = units
    key, k1, k2 = jax.random.split(key, 3)
    wl = 0.1 * jax.random.normal(k1, (LATENT_DIM, in_units), jnp.float32)
    bl = 0.1 * jax.random.normal(k2, (LATENT_DIM,), jnp.float32)
    params["latent"] = (wl, bl)
    return params


# ----------------------------------------------------------------------------- main
if __name__ == "__main__":
    key = jax.random.PRNGKey(0)
    key, kx = jax.random.split(key)
    C, H, W = BATHY_SHAPE
    x = jax.random.normal(kx, (BATCH, C, H, W), jnp.float32)  # NCHW like PyTorch

    params = init_params(key)
    kparams = prepare_params(params)

    forward = make_forward(BATCH, BATHY_SHAPE, CONV_FILTERS, DENSE_LAYERS, LATENT_DIM)
    z = forward(x, kparams)
    z = jax.block_until_ready(z)

    z_ref = reference_forward(x, params)
    assert z.shape == (BATCH, LATENT_DIM), z.shape
    # Kernel uses bf16 MXU operands with f32 accumulation; expected deviation from
    # the f32 reference is ~1e-3 absolute, so 2e-2 still catches structural errors.
    assert jnp.allclose(z, z_ref, rtol=2e-2, atol=2e-2), (
        "mismatch vs reference", float(jnp.max(jnp.abs(z - z_ref))))

    print("KERNEL_OK")
</pallas_src>

<mosaic_0001>
module attributes {stable_mosaic.version = 11 : i64} {
  func.func @_roll_probe_kernel(%arg0: memref<8x128xi32, #tpu.memory_space<vmem>>, %arg1: memref<8x128xi32, #tpu.memory_space<vmem>>) attributes {dimension_semantics = [], scalar_prefetch = 0 : i64, scratch_operands = 0 : i64, tpu.core_type = #tpu.core_type<tc>} {
    %c0 = arith.constant 0 : index
    %c0_0 = arith.constant 0 : index
    %0 = vector.load %arg0[%c0, %c0_0] : memref<8x128xi32, #tpu.memory_space<vmem>>, vector<8x128xi32>
    %c1_i32 = arith.constant 1 : i32
    %1 = tpu.dynamic_rotate %0 by %c1_i32 dim 1 : vector<8x128xi32>, i32 -> vector<8x128xi32>
    %c0_1 = arith.constant 0 : index
    %c0_2 = arith.constant 0 : index
    %2 = vector.load %arg1[%c0_1, %c0_2] : memref<8x128xi32, #tpu.memory_space<vmem>>, vector<8x128xi32>
    tpu.vector_store %arg1[%c0_1, %c0_2], %1 {strides = array<i32>} : memref<8x128xi32, #tpu.memory_space<vmem>>, vector<8x128xi32>,
    return
  }
}

</mosaic_0001>

<llo_original>
// kernel: tpu_custom_call.1
$region0: #{tpu_custom_call.1}
  #allocation0 [shape = 'u32[]', space=smem, size = 0x4, offset = 0x4, fixed_abs, tag = 'smem constant byte address 0x4 - core index']
  #allocation1 [shape = 'u32[144,128]{1,0:T(1,128)}', space=vmem, size = 0x12000, scoped, tag = 'internal scratch']
  %s0 = inlined_call_operand.hbm [shape: s32[8,128], index: 0, kind: input, shape index: {}]
  %s1 = inlined_call_operand.hbm [shape: s32[8,128], index: 1, kind: output, shape index: {}]
  %s2 = sld [smem:[#allocation0]]
  $region18: #{tpu_custom_call.1} parent=0
    _
  %s4 = ssub.s32 1, %s2
  %s5 = scalar_select 0, %s4, %s2
  $region1: #{tpu_custom_call.1} parent=0
    #allocation2 [shape = 'u8[4096]{0}', space=vmem, size = 0x1000, scoped, tag = 'input window, operand 0, single buffered']
    #allocation3 [shape = 's32[1]{0}', space=sflag, size = 0x4, scoped, tag = 'scoped memory for tpu_custom_call.1']
    #allocation4 [shape = 's32[1]{0}', space=sflag, size = 0x4, scoped, tag = 'scoped memory for tpu_custom_call.1']
    #allocation5 [shape = 'u8[4096]{0}', space=vmem, size = 0x1000, scoped, tag = 'output window, operand 0, single buffered']
    %6 = vsyncpa [#allocation3], 0
    %7 = vsyncpa [#allocation4], 0
    // Predicated region
    $region2: #{tpu_custom_call.1} parent=1 // pred_check
      _
    $region3: #{tpu_custom_call.1} parent=1 // pred_check_branch
      %9 = sbr.rel (0) target = $region5
    $region4: #{tpu_custom_call.1} parent=1 // pred_region
      %s11 = ssub.s32 128, 128
      %12 = vsyncadd [#allocation3], %s11
      %s14 = sshll.u32 [#allocation2], 4
      %s15 = int_to_ptr.vmem [resolvable:$true] %s14
      %17 = dma.hbm_to_vmem [thread:$0]  %s0, 128, %s15, [#allocation3]
    $region5: #{tpu_custom_call.1} parent=1 // pred_fallthru
      _
    // Predicated region
    $region6: #{tpu_custom_call.1} parent=1 // pred_check
      _
    $region7: #{tpu_custom_call.1} parent=1 // pred_check_branch
      %19 = sbr.rel (0) target = $region9
    $region8: #{tpu_custom_call.1} parent=1 // pred_region
      %20 = dma.done [#allocation3], 128
    $region9: #{tpu_custom_call.1} parent=1 // pred_fallthru
      _
    %v21 = vld [vmem:[#allocation2] sm:$0xff]
    %22 = vrot.lane.b32.xlu0 %v21, 1
    %v23 = vpop.permute.xlu0 %22
    %24 = vst [vmem:[#allocation5] sm:$0xff] %v23
    // Predicated region
    $region10: #{tpu_custom_call.1} parent=1 // pred_check
      _
    $region11: #{tpu_custom_call.1} parent=1 // pred_check_branch
      %26 = sbr.rel (0) target = $region13
    $region12: #{tpu_custom_call.1} parent=1 // pred_region
      %s28 = ssub.s32 128, 128
      %29 = vsyncadd [#allocation4], %s28
      %s31 = sshll.u32 [#allocation5], 4
      %s32 = int_to_ptr.vmem [resolvable:$true] %s31
      %34 = dma.vmem_to_hbm [thread:$0]  %s32, 128, %s1, [#allocation4]
    $region13: #{tpu_custom_call.1} parent=1 // pred_fallthru
      _
    // Predicated region
    $region14: #{tpu_custom_call.1} parent=1 // pred_check
      _
    $region15: #{tpu_custom_call.1} parent=1 // pred_check_branch
      %36 = sbr.rel (0) target = $region17
    $region16: #{tpu_custom_call.1} parent=1 // pred_region
      %37 = dma.done [#allocation4], 128
    $region17: #{tpu_custom_call.1} parent=1 // pred_fallthru
      _
    %38 = vsyncpa [#allocation3], 1
    %39 = vsyncpa [#allocation4], 1

</llo_original>
